<compile_context>
chip_gen: v7x
topology: tpu7x:2x2x1
jax: 0.10.0
libtpu: 0.0.40
codegen_flags: <defaults>
</compile_context>

<pallas_src>
import jax
import jax.numpy as jnp
from jax.experimental import pallas as pl
from jax.experimental.pallas import tpu as pltpu


# ---------------------------------------------------------------------------
# Kernel
# ---------------------------------------------------------------------------
def mlp_kernel(x_ref, w_ref, b_ref, o_ref):
    """Feature-major MLP tile.

    x_ref : (8,  TB)  rows 0:7 = features, row 7 = constant 1.0 (bias feature)
    w_ref : (80, 16)  packed weights, 16-row-aligned chunks:
                        0:16   [w1.T | b1] in cols 0:8 (cols 8:16 zero)
                        16:48  [w2.T ; w3_top.T]   (fused fc2 / fc3-top)
                        48:64  w3_bot.T
                        64:80  w4.T padded to 16 rows (rows 0:2 real)
    b_ref : (16, 4)   packed bias columns [b2 | b3 | b4(padded) | 0]
    o_ref : (2,  TB)  logits, batch on lanes
    """
    cd = w_ref.dtype  # compute dtype of MXU operands (f32 or bf16)

    def to_cd(a):
        return a if a.dtype == cd else a.astype(cd)

    x = to_cd(x_ref[...])                        # (8, TB)

    # static slices into the packed slabs (all row offsets 16-aligned)
    w1a = w_ref[0:16, 0:8]                       # (16, 8)   [w1.T | b1]
    w23 = w_ref[16:48, :]                        # (32, 16)  [w2.T ; w3_top.T]
    w3b = w_ref[48:64, :]                        # (16, 16)  w3_bot.T
    w4  = w_ref[64:80, :]                        # (16, 16)  w4.T (rows 0:2 real)

    b2 = b_ref[:, 0:1]                           # (16, 1)
    b3 = b_ref[:, 1:2]                           # (16, 1)
    b4 = b_ref[0:2, 2:3]                         # (2, 1)

    # fc1 + relu (bias folded into the constant-1 feature row)
    h = jnp.maximum(jnp.dot(w1a, x, preferred_element_type=jnp.float32), 0.0)   # (16, TB)

    # fused fc2 / fc3-top: one MXU push for both
    f = jnp.dot(w23, to_cd(h), preferred_element_type=jnp.float32)              # (32, TB)

    # fc2 + relu
    h1 = jnp.maximum(f[0:16, :] + b2, 0.0)                                       # (16, TB)

    # fc3 + relu, concat-free: relu(h@w3_top + h1@w3_bot + b3) in transposed form
    h3 = jnp.maximum(
        f[16:32, :]
        + jnp.dot(w3b, to_cd(h1), preferred_element_type=jnp.float32)
        + b3,
        0.0,
    )                                                                            # (16, TB)

    # fc4 (no activation); only rows 0:2 are real outputs
    out = jnp.dot(w4, to_cd(h3), preferred_element_type=jnp.float32)             # (16, TB)
    o_ref[...] = (out[0:2, :] + b4).astype(o_ref.dtype)                          # (2, TB)


# ---------------------------------------------------------------------------
# Parameter packing
# ---------------------------------------------------------------------------
def pack_params(params, compute_dtype=jnp.float32):
    """Pack the 8 Linear params into one weight slab + one bias slab.

    Weight slab (80, 16), 16-row-aligned chunks (bf16-tile friendly):
        rows  0:16  cols 0:7 = w1.T, col 7 = b1 (bias folded), cols 8:16 = 0
        rows 16:48  [w2.T ; w3_top.T]   (fused fc2 / fc3-top weights)
        rows 48:64  w3_bot.T
        rows 64:80  w4.T padded to 16 rows (rows 0:2 real)
    Bias slab (16, 4) columns: [b2 | b3 | b4 padded | 0]  (kept in f32).
    """
    (w1, b1, w2, b2, w3, b3, w4, b4) = params
    w3_top, w3_bot = w3[:16], w3[16:]

    wa = jnp.zeros((16, 16), jnp.float32)
    wa = wa.at[:, 0:7].set(w1.T)
    wa = wa.at[:, 7].set(b1[0])                                   # fold fc1 bias

    w23 = jnp.concatenate([w2.T, w3_top.T], axis=0)               # (32, 16)
    w3bT = w3_bot.T                                               # (16, 16)
    w4T = jnp.zeros((16, 16), jnp.float32).at[0:2, :].set(w4.T)   # (16, 16)

    w_packed = jnp.concatenate([wa, w23, w3bT, w4T], axis=0)      # (80, 16)

    b_packed = jnp.zeros((16, 4), jnp.float32)
    b_packed = b_packed.at[:, 0].set(b2[0])
    b_packed = b_packed.at[:, 1].set(b3[0])
    b_packed = b_packed.at[0:2, 2].set(b4[0])
    return w_packed.astype(compute_dtype), b_packed


# ---------------------------------------------------------------------------
# Wrapper
# ---------------------------------------------------------------------------
def _pick_block_b(B, block_b):
    if B <= 256:
        return B                         # single tile; lane dim == full batch
    if block_b is None:
        block_b = 8192                   # large lane-dense tiles: fewer grid steps
    # ensure >= 2 grid steps so v7x megacore can shard the batch axis
    block_b = min(block_b, pl.cdiv(B, 2))
    # lane-axis blocks must be a multiple of 128 (or the full dim)
    block_b = max(128, (block_b // 128) * 128)
    return block_b


def net_forward(x, w_packed, b_packed, *, block_b=None):
    """Forward pass for x of shape (B, 7); returns (B, 2) float32 logits.

    Internally uses a feature-major layout (batch on lanes).  A producer that
    already emits the (8, B) feature-major slab would skip the transpose here.
    """
    B, F = x.shape
    assert F == 7

    # features + constant-1.0 bias feature on sublanes, batch on lanes
    xT = jnp.concatenate([x.T, jnp.ones((1, B), x.dtype)], axis=0)   # (8, B)

    tb = _pick_block_b(B, block_b)
    grid = (pl.cdiv(B, tb),)

    outT = pl.pallas_call(
        mlp_kernel,
        out_shape=jax.ShapeDtypeStruct((2, B), jnp.float32),
        grid=grid,
        in_specs=[
            pl.BlockSpec((8, tb), lambda i: (0, i)),     # x: pipelined over batch (lanes)
            pl.BlockSpec((80, 16), lambda i: (0, 0)),    # weights: fetched once, VMEM-resident
            pl.BlockSpec((16, 4), lambda i: (0, 0)),     # biases : fetched once, VMEM-resident
        ],
        out_specs=pl.BlockSpec((2, tb), lambda i: (0, i)),
        compiler_params=pltpu.CompilerParams(
            dimension_semantics=("parallel",),           # shard batch axis across TCs (v7x)
            vmem_limit_bytes=32 * 1024 * 1024,
        ),
    )(xT, w_packed, b_packed)

    return outT.T                                        # (B, 2)


# ---------------------------------------------------------------------------
# Params / reference
# ---------------------------------------------------------------------------
def init_params(key):
    """Deterministic init mimicking nn.Linear (uniform +-1/sqrt(fan_in)).
    Weights stored as (in_features, out_features); biases as (1, out)."""
    def linear(k, fan_in, fan_out):
        kw, kb = jax.random.split(k)
        bound = 1.0 / jnp.sqrt(fan_in)
        w = jax.random.uniform(kw, (fan_in, fan_out), jnp.float32, -bound, bound)
        b = jax.random.uniform(kb, (1, fan_out), jnp.float32, -bound, bound)
        return w, b

    k1, k2, k3, k4 = jax.random.split(key, 4)
    w1, b1 = linear(k1, 7, 16)
    w2, b2 = linear(k2, 16, 16)
    w3, b3 = linear(k3, 32, 16)
    w4, b4 = linear(k4, 16, 2)
    return (w1, b1, w2, b2, w3, b3, w4, b4)


def reference_forward(x, params):
    """Plain-JAX reference with the module's exact semantics."""
    (w1, b1, w2, b2, w3, b3, w4, b4) = params
    h = jax.nn.relu(x @ w1 + b1)
    h1 = jax.nn.relu(h @ w2 + b2)
    h3 = jax.nn.relu(jnp.concatenate([h, h1], axis=1) @ w3 + b3)
    return h3 @ w4 + b4


if __name__ == "__main__":
    key = jax.random.PRNGKey(0)
    kx, kp = jax.random.split(key)

    params = init_params(kp)
    w_packed, b_packed = pack_params(params)

    # small single-tile check
    x_small = jax.random.normal(kx, (8, 7), dtype=jnp.float32)
    out = net_forward(x_small, w_packed, b_packed)
    jax.block_until_ready(out)
    ref = reference_forward(x_small, params)
    assert out.shape == (8, 2)
    assert jnp.allclose(out, ref, atol=2e-5, rtol=1e-5)

    # multi-tile check (exercises the 1-D batch grid / 128-lane tiles)
    x_big = jax.random.normal(kx, (384, 7), dtype=jnp.float32)
    out_big = net_forward(x_big, w_packed, b_packed)
    jax.block_until_ready(out_big)
    ref_big = reference_forward(x_big, params)
    assert out_big.shape == (384, 2)
    assert jnp.allclose(out_big, ref_big, atol=2e-5, rtol=1e-5)

    # bf16 weight path (x stays f32 in HBM, cast in-kernel) — looser tolerance
    wb16, bb16 = pack_params(params, compute_dtype=jnp.bfloat16)
    out_bf16 = net_forward(x_big, wb16, bb16)
    jax.block_until_ready(out_bf16)
    assert jnp.allclose(out_bf16, ref_big, atol=5e-2, rtol=5e-2)

    print("KERNEL_OK")
</pallas_src>

<mosaic_0001>
module attributes {stable_mosaic.version = 11 : i64} {
  func.func @mlp_kernel(%arg0: i32, %arg1: memref<8x8xf32, #tpu.memory_space<vmem>>, %arg2: memref<80x16xf32, #tpu.memory_space<vmem>>, %arg3: memref<16x4xf32, #tpu.memory_space<vmem>>, %arg4: memref<2x8xf32, #tpu.memory_space<vmem>>) attributes {dimension_semantics = [#tpu.dimension_semantics<parallel>], iteration_bounds = array<i64: 1>, scalar_prefetch = 0 : i64, scratch_operands = 0 : i64, tpu.core_type = #tpu.core_type<tc>, window_params = [{transform_indices = @transform_0, window_bounds = array<i64: 8, 8>}, {pipeline_mode = #tpu.pipeline_mode<synchronous>, transform_indices = @transform_1, window_bounds = array<i64: 80, 16>}, {pipeline_mode = #tpu.pipeline_mode<synchronous>, transform_indices = @transform_2, window_bounds = array<i64: 16, 4>}, {transform_indices = @transform_3, window_bounds = array<i64: 2, 8>}]} {
    %c0 = arith.constant 0 : index
    %c0_0 = arith.constant 0 : index
    %0 = vector.load %arg1[%c0, %c0_0] : memref<8x8xf32, #tpu.memory_space<vmem>>, vector<8x8xf32>
    %c0_1 = arith.constant 0 : index
    %c0_2 = arith.constant 0 : index
    %1 = vector.load %arg2[%c0_1, %c0_2] : memref<80x16xf32, #tpu.memory_space<vmem>>, vector<16x8xf32>
    %c16 = arith.constant 16 : index
    %c0_3 = arith.constant 0 : index
    %2 = vector.load %arg2[%c16, %c0_3] : memref<80x16xf32, #tpu.memory_space<vmem>>, vector<32x16xf32>
    %c48 = arith.constant 48 : index
    %c0_4 = arith.constant 0 : index
    %3 = vector.load %arg2[%c48, %c0_4] : memref<80x16xf32, #tpu.memory_space<vmem>>, vector<16x16xf32>
    %c64 = arith.constant 64 : index
    %c0_5 = arith.constant 0 : index
    %4 = vector.load %arg2[%c64, %c0_5] : memref<80x16xf32, #tpu.memory_space<vmem>>, vector<16x16xf32>
    %c0_6 = arith.constant 0 : index
    %c0_7 = arith.constant 0 : index
    %5 = vector.load %arg3[%c0_6, %c0_7] : memref<16x4xf32, #tpu.memory_space<vmem>>, vector<16x1xf32>
    %c0_8 = arith.constant 0 : index
    %c1 = arith.constant 1 : index
    %6 = vector.load %arg3[%c0_8, %c1] : memref<16x4xf32, #tpu.memory_space<vmem>>, vector<16x1xf32>
    %c0_9 = arith.constant 0 : index
    %c2 = arith.constant 2 : index
    %7 = vector.load %arg3[%c0_9, %c2] : memref<16x4xf32, #tpu.memory_space<vmem>>, vector<2x1xf32>
    %cst = arith.constant dense<0.000000e+00> : vector<16x8xf32>
    %8 = tpu.matmul %1, %0, %cst {dimension_numbers = #tpu.dot_dimension_numbers<[1], [0], [0], [1], [0, 0, 1, 1], [], []>} : vector<16x8xf32>, vector<8x8xf32>, vector<16x8xf32> -> vector<16x8xf32>
    %cst_10 = arith.constant 0.000000e+00 : f32
    %9 = vector.broadcast %cst_10 : f32 to vector<16x8xf32>
    %10 = arith.maximumf %8, %9 : vector<16x8xf32>
    %cst_11 = arith.constant dense<0.000000e+00> : vector<32x8xf32>
    %11 = tpu.matmul %2, %10, %cst_11 {dimension_numbers = #tpu.dot_dimension_numbers<[1], [0], [0], [1], [0, 0, 1, 1], [], []>} : vector<32x16xf32>, vector<16x8xf32>, vector<32x8xf32> -> vector<32x8xf32>
    %12 = vector.extract_strided_slice %11 {offsets = [0, 0], sizes = [16, 8], strides = [1, 1]} : vector<32x8xf32> to vector<16x8xf32>
    %13 = vector.broadcast %5 : vector<16x1xf32> to vector<16x8xf32>
    %14 = arith.addf %12, %13 : vector<16x8xf32>
    %cst_12 = arith.constant 0.000000e+00 : f32
    %15 = vector.broadcast %cst_12 : f32 to vector<16x8xf32>
    %16 = arith.maximumf %14, %15 : vector<16x8xf32>
    %17 = vector.extract_strided_slice %11 {offsets = [16, 0], sizes = [16, 8], strides = [1, 1]} : vector<32x8xf32> to vector<16x8xf32>
    %cst_13 = arith.constant dense<0.000000e+00> : vector<16x8xf32>
    %18 = tpu.matmul %3, %16, %cst_13 {dimension_numbers = #tpu.dot_dimension_numbers<[1], [0], [0], [1], [0, 0, 1, 1], [], []>} : vector<16x16xf32>, vector<16x8xf32>, vector<16x8xf32> -> vector<16x8xf32>
    %19 = arith.addf %17, %18 : vector<16x8xf32>
    %20 = vector.broadcast %6 : vector<16x1xf32> to vector<16x8xf32>
    %21 = arith.addf %19, %20 : vector<16x8xf32>
    %cst_14 = arith.constant 0.000000e+00 : f32
    %22 = vector.broadcast %cst_14 : f32 to vector<16x8xf32>
    %23 = arith.maximumf %21, %22 : vector<16x8xf32>
    %cst_15 = arith.constant dense<0.000000e+00> : vector<16x8xf32>
    %24 = tpu.matmul %4, %23, %cst_15 {dimension_numbers = #tpu.dot_dimension_numbers<[1], [0], [0], [1], [0, 0, 1, 1], [], []>} : vector<16x16xf32>, vector<16x8xf32>, vector<16x8xf32> -> vector<16x8xf32>
    %25 = vector.extract_strided_slice %24 {offsets = [0, 0], sizes = [2, 8], strides = [1, 1]} : vector<16x8xf32> to vector<2x8xf32>
    %26 = vector.broadcast %7 : vector<2x1xf32> to vector<2x8xf32>
    %27 = arith.addf %25, %26 : vector<2x8xf32>
    %c0_16 = arith.constant 0 : index
    %c0_17 = arith.constant 0 : index
    %28 = vector.load %arg4[%c0_16, %c0_17] : memref<2x8xf32, #tpu.memory_space<vmem>>, vector<2x8xf32>
    tpu.vector_store %arg4[%c0_16, %c0_17], %27 {strides = array<i32>} : memref<2x8xf32, #tpu.memory_space<vmem>>, vector<2x8xf32>,
    return
  }
  func.func @transform_0(%arg0: i32) -> (i32, i32) {
    %c0_i32 = arith.constant 0 : i32
    %c0_i32_0 = arith.constant 0 : i32
    return %c0_i32, %arg0 : i32, i32
  }
  func.func @transform_1(%arg0: i32) -> (i32, i32) {
    %c0_i32 = arith.constant 0 : i32
    %c0_i32_0 = arith.constant 0 : i32
    %c0_i32_1 = arith.constant 0 : i32
    return %c0_i32, %c0_i32_0 : i32, i32
  }
  func.func @transform_2(%arg0: i32) -> (i32, i32) {
    %c0_i32 = arith.constant 0 : i32
    %c0_i32_0 = arith.constant 0 : i32
    %c0_i32_1 = arith.constant 0 : i32
    return %c0_i32, %c0_i32_0 : i32, i32
  }
  func.func @transform_3(%arg0: i32) -> (i32, i32) {
    %c0_i32 = arith.constant 0 : i32
    %c0_i32_0 = arith.constant 0 : i32
    return %c0_i32, %arg0 : i32, i32
  }
}

</mosaic_0001>

<llo_original>
// kernel: tpu_custom_call.1
$region0: #{tpu_custom_call.1}
  #allocation0 [shape = 'u32[]', space=smem, size = 0x4, offset = 0x4, fixed_abs, tag = 'smem constant byte address 0x4 - core index']
  #allocation1 [shape = 'u32[144,128]{1,0:T(1,128)}', space=vmem, size = 0x12000, scoped, tag = 'internal scratch']
  %s0 = inlined_call_operand.vmem [shape: f32[8,8], index: 0, kind: input, shape index: {}]
  %s1 = inlined_call_operand.vmem [shape: f32[80,16], index: 1, kind: input, shape index: {}]
  %s2 = inlined_call_operand.vmem [shape: f32[16,4], index: 2, kind: input, shape index: {}]
  %s3 = inlined_call_operand.hbm [shape: f32[2,8], index: 3, kind: output, shape index: {}]
  %s4 = sld [smem:[#allocation0]]
  $region22: #{tpu_custom_call.1} parent=0
    _
  %s6 = ssub.s32 1, %s4
  %s7 = scalar_select 0, %s6, %s4
  $region1: #{tpu_custom_call.1} parent=0
    #allocation2 [shape = 'u8[1024]{0}', space=vmem, size = 0x400, scoped, tag = 'output window, operand 0, single buffered']
    #allocation3 [shape = 's32[1]{0}', space=sflag, size = 0x4, scoped, tag = 'scoped memory for tpu_custom_call.1']
    %8 = vsyncpa [#allocation3], 0
    // Predicated region
    $region2: #{tpu_custom_call.1} parent=1 // pred_check
      _
    $region3: #{tpu_custom_call.1} parent=1 // pred_check_branch
      %10 = sbr.rel (0) target = $region5
    $region4: #{tpu_custom_call.1} parent=1 // pred_region
      _
    $region5: #{tpu_custom_call.1} parent=1 // pred_fallthru
      _
    // Predicated region
    $region6: #{tpu_custom_call.1} parent=1 // pred_check
      _
    $region7: #{tpu_custom_call.1} parent=1 // pred_check_branch
      %12 = sbr.rel (0) target = $region9
    $region8: #{tpu_custom_call.1} parent=1 // pred_region
      _
    $region9: #{tpu_custom_call.1} parent=1 // pred_fallthru
      _
    // Predicated region
    $region10: #{tpu_custom_call.1} parent=1 // pred_check
      _
    $region11: #{tpu_custom_call.1} parent=1 // pred_check_branch
      %14 = sbr.rel (0) target = $region13
    $region12: #{tpu_custom_call.1} parent=1 // pred_region
      _
    $region13: #{tpu_custom_call.1} parent=1 // pred_fallthru
      _
    %v15 = vld [vmem:[%s0] sm:$0xff]
    %v16 = vld [vmem:[%s1] sm:$0xff]
    %v17 = vld [vmem:[%s1 + $0x8] sm:$0xff]
    %v18 = vld [vmem:[%s1 + $0x10] sm:$0xff]
    %v19 = vld [vmem:[%s1 + $0x18] sm:$0xff]
    %v20 = vld [vmem:[%s1 + $0x20] sm:$0xff]
    %v21 = vld [vmem:[%s1 + $0x28] sm:$0xff]
    %v22 = vld [vmem:[%s1 + $0x30] sm:$0xff]
    %v23 = vld [vmem:[%s1 + $0x38] sm:$0xff]
    %v24 = vld [vmem:[%s1 + $0x40] sm:$0xff]
    %v25 = vld [vmem:[%s1 + $0x48] sm:$0xff]
    %v26 = vld [vmem:[%s2] sm:$0xff]
    %v27 = vld [vmem:[%s2 + $0x8] sm:$0xff]
    %v28 = vld [vmem:[%s2] sm:$0x3]
    %vm29 = vcmask 64512
    %v31 = vsel %vm29, %v16, 0
    %v34 = vsel %vm29, %v17, 0
    %36 = vmatprep.subr.mxu0 0.0
    %37 = vmatpush1.msra.mxu0 %v15
    %38 = vmatprep.subr.mxu0 0.0
    %39 = vmatpush1.msra.mxu0 0.0
    %40 = vmatprep.subr.mxu0 0.0
    %41 = vmatpush1.msra.mxu0 0.0
    %42 = vmatprep.subr.mxu0 0.0
    %43 = vmatpush1.msra.mxu0 0.0
    %44 = vmatprep.subr.mxu0 0.0
    %45 = vmatpush1.msra.mxu0 0.0
    %46 = vmatprep.subr.mxu0 0.0
    %47 = vmatpush1.msra.mxu0 0.0
    %48 = vmatprep.subr.mxu0 0.0
    %49 = vmatpush1.msra.mxu0 0.0
    %50 = vmatprep.subr.mxu0 0.0
    %51 = vmatpush1.msra.mxu0 0.0
    %52 = vmatprep.subr.mxu0 0.0
    %53 = vmatpush1.msra.mxu0 0.0
    %54 = vmatprep.subr.mxu0 0.0
    %55 = vmatpush1.msra.mxu0 0.0
    %56 = vmatprep.subr.mxu0 0.0
    %57 = vmatpush1.msra.mxu0 0.0
    %58 = vmatprep.subr.mxu0 0.0
    %59 = vmatpush1.msra.mxu0 0.0
    %60 = vmatprep.subr.mxu0 0.0
    %61 = vmatpush1.msra.mxu0 0.0
    %62 = vmatprep.subr.mxu0 0.0
    %63 = vmatpush1.msra.mxu0 0.0
    %64 = vmatprep.subr.mxu0 0.0
    %65 = vmatpush1.msra.mxu0 0.0
    %66 = vmatprep.subr.mxu0 0.0
    %67 = vmatpush1.msra.mxu0 0.0
    %68 = vmatprep.subr.mxu0 0.0
    %69 = vmatpush1.msra.mxu0 0.0
    %70 = vmatprep.subr.mxu0 0.0
    %71 = vmatpush1.msra.mxu0 0.0
    %72 = vmatprep.subr.mxu0 0.0
    %73 = vmatpush1.msra.mxu0 0.0
    %74 = vmatprep.subr.mxu0 0.0
    %75 = vmatpush1.msra.mxu0 0.0
    %76 = vmatprep.subr.mxu0 0.0
    %77 = vmatpush1.msra.mxu0 0.0
    %78 = vmatprep.subr.mxu0 0.0
    %79 = vmatpush1.msra.mxu0 0.0
    %80 = vmatprep.subr.mxu0 0.0
    %81 = vmatpush1.msra.mxu0 0.0
    %82 = vmatprep.subr.mxu0 0.0
    %83 = vmatpush1.msra.mxu0 0.0
    %84 = vmatprep.subr.mxu0 0.0
    %85 = vmatpush1.msra.mxu0 0.0
    %86 = vmatprep.subr.mxu0 0.0
    %87 = vmatpush1.msra.mxu0 0.0
    %88 = vmatprep.subr.mxu0 0.0
    %89 = vmatpush1.msra.mxu0 0.0
    %90 = vmatprep.subr.mxu0 0.0
    %91 = vmatpush1.msra.mxu0 0.0
    %92 = vmatprep.subr.mxu0 0.0
    %93 = vmatpush1.msra.mxu0 0.0
    %94 = vmatprep.subr.mxu0 0.0
    %95 = vmatpush1.msra.mxu0 0.0
    %96 = vmatprep.subr.mxu0 0.0
    %97 = vmatpush1.msra.mxu0 0.0
    %98 = vmatprep.subr.mxu0 0.0
    %99 = vmatpush1.msra.mxu0 0.0
    %100 = vmatprep.mubr.f32.mxu0 0.0
    %101 = vmatmul.mubr.f32.gmra.mrb[0].mxu0 %v31
    %v102 = vpop.f32.mrb[0].mxu0
    %v103 = vadd.f32 0.0, %v102
    %v104 = vpop.f32.mrb[0].mxu0
    %105 = vmatprep.mubr.f32.mxu0 0.0
    %106 = vmatmul.mubr.f32.gmra.mrb[0].mxu0 %v34
    %v107 = vpop.f32.mrb[0].mxu0
    %v108 = vadd.f32 0.0, %v107
    %v109 = vpop.f32.mrb[0].mxu0
    %110 = vdwg.mxu0
    %v111 = vmax.f32 %v103, 0.0
    %v112 = vmax.f32 %v108, 0.0
    %vm113 = vcmask 130048
    %v115 = vsel %vm113, %v18, 0
    %v118 = vsel %vm113, %v19, 0
    %v121 = vsel %vm113, %v20, 0
    %v124 = vsel %vm113, %v21, 0
    %126 = vmatprep.subr.mxu0 0.0
    %127 = vmatpush1.msra.mxu0 %v111
    %128 = vmatprep.subr.mxu0 0.0
    %129 = vmatpush1.msra.mxu0 %v112
    %130 = vmatprep.subr.mxu0 0.0
    %131 = vmatpush1.msra.mxu0 0.0
    %132 = vmatprep.subr.mxu0 0.0
    %133 = vmatpush1.msra.mxu0 0.0
    %134 = vmatprep.subr.mxu0 0.0
    %135 = vmatpush1.msra.mxu0 0.0
    %136 = vmatprep.subr.mxu0 0.0
    %137 = vmatpush1.msra.mxu0 0.0
    %138 = vmatprep.subr.mxu0 0.0
    %139 = vmatpush1.msra.mxu0 0.0
    %140 = vmatprep.subr.mxu0 0.0
    %141 = vmatpush1.msra.mxu0 0.0
    %142 = vmatprep.subr.mxu0 0.0
    %143 = vmatpush1.msra.mxu0 0.0
    %144 = vmatprep.subr.mxu0 0.0
    %145 = vmatpush1.msra.mxu0 0.0
    %146 = vmatprep.subr.mxu0 0.0
    %147 = vmatpush1.msra.mxu0 0.0
    %148 = vmatprep.subr.mxu0 0.0
    %149 = vmatpush1.msra.mxu0 0.0
    %150 = vmatprep.subr.mxu0 0.0
    %151 = vmatpush1.msra.mxu0 0.0
    %152 = vmatprep.subr.mxu0 0.0
    %153 = vmatpush1.msra.mxu0 0.0
    %154 = vmatprep.subr.mxu0 0.0
    %155 = vmatpush1.msra.mxu0 0.0
    %156 = vmatprep.subr.mxu0 0.0
    %157 = vmatpush1.msra.mxu0 0.0
    %158 = vmatprep.subr.mxu0 0.0
    %159 = vmatpush1.msra.mxu0 0.0
    %160 = vmatprep.subr.mxu0 0.0
    %161 = vmatpush1.msra.mxu0 0.0
    %162 = vmatprep.subr.mxu0 0.0
    %163 = vmatpush1.msra.mxu0 0.0
    %164 = vmatprep.subr.mxu0 0.0
    %165 = vmatpush1.msra.mxu0 0.0
    %166 = vmatprep.subr.mxu0 0.0
    %167 = vmatpush1.msra.mxu0 0.0
    %168 = vmatprep.subr.mxu0 0.0
    %169 = vmatpush1.msra.mxu0 0.0
    %170 = vmatprep.subr.mxu0 0.0
    %171 = vmatpush1.msra.mxu0 0.0
    %172 = vmatprep.subr.mxu0 0.0
    %173 = vmatpush1.msra.mxu0 0.0
    %174 = vmatprep.subr.mxu0 0.0
    %175 = vmatpush1.msra.mxu0 0.0
    %176 = vmatprep.subr.mxu0 0.0
    %177 = vmatpush1.msra.mxu0 0.0
    %178 = vmatprep.subr.mxu0 0.0
    %179 = vmatpush1.msra.mxu0 0.0
    %180 = vmatprep.subr.mxu0 0.0
    %181 = vmatpush1.msra.mxu0 0.0
    %182 = vmatprep.subr.mxu0 0.0
    %183 = vmatpush1.msra.mxu0 0.0
    %184 = vmatprep.subr.mxu0 0.0
    %185 = vmatpush1.msra.mxu0 0.0
    %186 = vmatprep.subr.mxu0 0.0
    %187 = vmatpush1.msra.mxu0 0.0
    %188 = vmatprep.subr.mxu0 0.0
    %189 = vmatpush1.msra.mxu0 0.0
    %190 = vmatprep.mubr.f32.mxu0 0.0
    %191 = vmatmul.mubr.f32.gmra.mrb[0].mxu0 %v115
    %v192 = vpop.f32.mrb[0].mxu0
    %v193 = vadd.f32 0.0, %v192
    %v194 = vpop.f32.mrb[0].mxu0
    %195 = vmatprep.mubr.f32.mxu0 0.0
    %196 = vmatmul.mubr.f32.gmra.mrb[0].mxu0 %v118
    %v197 = vpop.f32.mrb[0].mxu0
    %v198 = vadd.f32 0.0, %v197
    %v199 = vpop.f32.mrb[0].mxu0
    %200 = vmatprep.mubr.f32.mxu0 0.0
    %201 = vmatmul.mubr.f32.gmra.mrb[0].mxu0 %v121
    %v202 = vpop.f32.mrb[0].mxu0
    %v203 = vadd.f32 0.0, %v202
    %v204 = vpop.f32.mrb[0].mxu0
    %205 = vmatprep.mubr.f32.mxu0 0.0
    %206 = vmatmul.mubr.f32.gmra.mrb[0].mxu0 %v124
    %v207 = vpop.f32.mrb[0].mxu0
    %v208 = vadd.f32 0.0, %v207
    %v209 = vpop.f32.mrb[0].mxu0
    %210 = vdwg.mxu0
    %212 = vset.pattern.permute.xlu0 0
    %213 = vperm.xlu0 %212, %v26
    %v214 = vpop.permute.xlu0 %213
    %217 = vset.pattern.permute.xlu0 0
    %218 = vperm.xlu0 %217, %v27
    %v219 = vpop.permute.xlu0 %218
    %v221 = vadd.f32 %v193, %v214
    %v222 = vadd.f32 %v198, %v219
    %v223 = vmax.f32 %v221, 0.0
    %v224 = vmax.f32 %v222, 0.0
    %v226 = vsel %vm113, %v22, 0
    %v229 = vsel %vm113, %v23, 0
    %231 = vmatprep.subr.mxu0 0.0
    %232 = vmatpush1.msra.mxu0 %v223
    %233 = vmatprep.subr.mxu0 0.0
    %234 = vmatpush1.msra.mxu0 %v224
    %235 = vmatprep.subr.mxu0 0.0
    %236 = vmatpush1.msra.mxu0 0.0
    %237 = vmatprep.subr.mxu0 0.0
    %238 = vmatpush1.msra.mxu0 0.0
    %239 = vmatprep.subr.mxu0 0.0
    %240 = vmatpush1.msra.mxu0 0.0
    %241 = vmatprep.subr.mxu0 0.0
    %242 = vmatpush1.msra.mxu0 0.0
    %243 = vmatprep.subr.mxu0 0.0
    %244 = vmatpush1.msra.mxu0 0.0
    %245 = vmatprep.subr.mxu0 0.0
    %246 = vmatpush1.msra.mxu0 0.0
    %247 = vmatprep.subr.mxu0 0.0
    %248 = vmatpush1.msra.mxu0 0.0
    %249 = vmatprep.subr.mxu0 0.0
    %250 = vmatpush1.msra.mxu0 0.0
    %251 = vmatprep.subr.mxu0 0.0
    %252 = vmatpush1.msra.mxu0 0.0
    %253 = vmatprep.subr.mxu0 0.0
    %254 = vmatpush1.msra.mxu0 0.0
    %255 = vmatprep.subr.mxu0 0.0
    %256 = vmatpush1.msra.mxu0 0.0
    %257 = vmatprep.subr.mxu0 0.0
    %258 = vmatpush1.msra.mxu0 0.0
    %259 = vmatprep.subr.mxu0 0.0
    %260 = vmatpush1.msra.mxu0 0.0
    %261 = vmatprep.subr.mxu0 0.0
    %262 = vmatpush1.msra.mxu0 0.0
    %263 = vmatprep.subr.mxu0 0.0
    %264 = vmatpush1.msra.mxu0 0.0
    %265 = vmatprep.subr.mxu0 0.0
    %266 = vmatpush1.msra.mxu0 0.0
    %267 = vmatprep.subr.mxu0 0.0
    %268 = vmatpush1.msra.mxu0 0.0
    %269 = vmatprep.subr.mxu0 0.0
    %270 = vmatpush1.msra.mxu0 0.0
    %271 = vmatprep.subr.mxu0 0.0
    %272 = vmatpush1.msra.mxu0 0.0
    %273 = vmatprep.subr.mxu0 0.0
    %274 = vmatpush1.msra.mxu0 0.0
    %275 = vmatprep.subr.mxu0 0.0
    %276 = vmatpush1.msra.mxu0 0.0
    %277 = vmatprep.subr.mxu0 0.0
    %278 = vmatpush1.msra.mxu0 0.0
    %279 = vmatprep.subr.mxu0 0.0
    %280 = vmatpush1.msra.mxu0 0.0
    %281 = vmatprep.subr.mxu0 0.0
    %282 = vmatpush1.msra.mxu0 0.0
    %283 = vmatprep.subr.mxu0 0.0
    %284 = vmatpush1.msra.mxu0 0.0
    %285 = vmatprep.subr.mxu0 0.0
    %286 = vmatpush1.msra.mxu0 0.0
    %287 = vmatprep.subr.mxu0 0.0
    %288 = vmatpush1.msra.mxu0 0.0
    %289 = vmatprep.subr.mxu0 0.0
    %290 = vmatpush1.msra.mxu0 0.0
    %291 = vmatprep.subr.mxu0 0.0
    %292 = vmatpush1.msra.mxu0 0.0
    %293 = vmatprep.subr.mxu0 0.0
    %294 = vmatpush1.msra.mxu0 0.0
    %295 = vmatprep.mubr.f32.mxu0 0.0
    %296 = vmatmul.mubr.f32.gmra.mrb[0].mxu0 %v226
    %v297 = vpop.f32.mrb[0].mxu0
    %v298 = vadd.f32 0.0, %v297
    %v299 = vpop.f32.mrb[0].mxu0
    %300 = vmatprep.mubr.f32.mxu0 0.0
    %301 = vmatmul.mubr.f32.gmra.mrb[0].mxu0 %v229
    %v302 = vpop.f32.mrb[0].mxu0
    %v303 = vadd.f32 0.0, %v302
    %v304 = vpop.f32.mrb[0].mxu0
    %305 = vdwg.mxu0
    %v306 = vadd.f32 %v203, %v298
    %v307 = vadd.f32 %v208, %v303
    %308 = vset.pattern.permute.xlu0 1
    %309 = vperm.xlu0 %308, %v26
    %v310 = vpop.permute.xlu0 %309
    %312 = vset.pattern.permute.xlu0 1
    %313 = vperm.xlu0 %312, %v27
    %v314 = vpop.permute.xlu0 %313
    %v316 = vadd.f32 %v306, %v310
    %v317 = vadd.f32 %v307, %v314
    %v318 = vmax.f32 %v316, 0.0
    %v319 = vmax.f32 %v317, 0.0
    %v321 = vsel %vm113, %v24, 0
    %v324 = vsel %vm113, %v25, 0
    %326 = vmatprep.subr.mxu0 0.0
    %327 = vmatpush1.msra.mxu0 %v318
    %328 = vmatprep.subr.mxu0 0.0
    %329 = vmatpush1.msra.mxu0 %v319
    %330 = vmatprep.subr.mxu0 0.0
    %331 = vmatpush1.msra.mxu0 0.0
    %332 = vmatprep.subr.mxu0 0.0
    %333 = vmatpush1.msra.mxu0 0.0
    %334 = vmatprep.subr.mxu0 0.0
    %335 = vmatpush1.msra.mxu0 0.0
    %336 = vmatprep.subr.mxu0 0.0
    %337 = vmatpush1.msra.mxu0 0.0
    %338 = vmatprep.subr.mxu0 0.0
    %339 = vmatpush1.msra.mxu0 0.0
    %340 = vmatprep.subr.mxu0 0.0
    %341 = vmatpush1.msra.mxu0 0.0
    %342 = vmatprep.subr.mxu0 0.0
    %343 = vmatpush1.msra.mxu0 0.0
    %344 = vmatprep.subr.mxu0 0.0
    %345 = vmatpush1.msra.mxu0 0.0
    %346 = vmatprep.subr.mxu0 0.0
    %347 = vmatpush1.msra.mxu0 0.0
    %348 = vmatprep.subr.mxu0 0.0
    %349 = vmatpush1.msra.mxu0 0.0
    %350 = vmatprep.subr.mxu0 0.0
    %351 = vmatpush1.msra.mxu0 0.0
    %352 = vmatprep.subr.mxu0 0.0
    %353 = vmatpush1.msra.mxu0 0.0
    %354 = vmatprep.subr.mxu0 0.0
    %355 = vmatpush1.msra.mxu0 0.0
    %356 = vmatprep.subr.mxu0 0.0
    %357 = vmatpush1.msra.mxu0 0.0
    %358 = vmatprep.subr.mxu0 0.0
    %359 = vmatpush1.msra.mxu0 0.0
    %360 = vmatprep.subr.mxu0 0.0
    %361 = vmatpush1.msra.mxu0 0.0
    %362 = vmatprep.subr.mxu0 0.0
    %363 = vmatpush1.msra.mxu0 0.0
    %364 = vmatprep.subr.mxu0 0.0
    %365 = vmatpush1.msra.mxu0 0.0
    %366 = vmatprep.subr.mxu0 0.0
    %367 = vmatpush1.msra.mxu0 0.0
    %368 = vmatprep.subr.mxu0 0.0
    %369 = vmatpush1.msra.mxu0 0.0
    %370 = vmatprep.subr.mxu0 0.0
    %371 = vmatpush1.msra.mxu0 0.0
    %372 = vmatprep.subr.mxu0 0.0
    %373 = vmatpush1.msra.mxu0 0.0
    %374 = vmatprep.subr.mxu0 0.0
    %375 = vmatpush1.msra.mxu0 0.0
    %376 = vmatprep.subr.mxu0 0.0
    %377 = vmatpush1.msra.mxu0 0.0
    %378 = vmatprep.subr.mxu0 0.0
    %379 = vmatpush1.msra.mxu0 0.0
    %380 = vmatprep.subr.mxu0 0.0
    %381 = vmatpush1.msra.mxu0 0.0
    %382 = vmatprep.subr.mxu0 0.0
    %383 = vmatpush1.msra.mxu0 0.0
    %384 = vmatprep.subr.mxu0 0.0
    %385 = vmatpush1.msra.mxu0 0.0
    %386 = vmatprep.subr.mxu0 0.0
    %387 = vmatpush1.msra.mxu0 0.0
    %388 = vmatprep.subr.mxu0 0.0
    %389 = vmatpush1.msra.mxu0 0.0
    %390 = vmatprep.mubr.f32.mxu0 0.0
    %391 = vmatmul.mubr.f32.gmra.mrb[0].mxu0 %v321
    %v392 = vpop.f32.mrb[0].mxu0
    %v393 = vadd.f32 0.0, %v392
    %v394 = vpop.f32.mrb[0].mxu0
    %395 = vmatprep.mubr.f32.mxu0 0.0
    %396 = vmatmul.mubr.f32.gmra.mrb[0].mxu0 %v324
    %v397 = vpop.f32.mrb[0].mxu0
    %v398 = vpop.f32.mrb[0].mxu0
    %399 = vdwg.mxu0
    %401 = vset.pattern.permute.xlu0 2
    %402 = vperm.xlu0 %401, %v28
    %v403 = vpop.permute.xlu0 %402
    %v405 = vadd.f32 %v393, %v403
    %vm406 = vcmask 58368
    %407 = vst.msk [vmem:[#allocation2] sm:$0x3] %vm406, %v405
    // Predicated region
    $region14: #{tpu_custom_call.1} parent=1 // pred_check
      _
    $region15: #{tpu_custom_call.1} parent=1 // pred_check_branch
      %409 = sbr.rel (0) target = $region17
    $region16: #{tpu_custom_call.1} parent=1 // pred_region
      %s411 = ssub.s32 32, 32
      %412 = vsyncadd [#allocation3], %s411
      %s414 = sshll.u32 [#allocation2], 4
      %s415 = int_to_ptr.vmem [resolvable:$true] %s414
      %417 = dma.vmem_to_hbm [thread:$0]  %s415, 32, %s3, [#allocation3]
    $region17: #{tpu_custom_call.1} parent=1 // pred_fallthru
      _
    // Predicated region
    $region18: #{tpu_custom_call.1} parent=1 // pred_check
      _
    $region19: #{tpu_custom_call.1} parent=1 // pred_check_branch
      %419 = sbr.rel (0) target = $region21
    $region20: #{tpu_custom_call.1} parent=1 // pred_region
      %420 = dma.done [#allocation3], 32
    $region21: #{tpu_custom_call.1} parent=1 // pred_fallthru
      _
    %421 = vsyncpa [#allocation3], 1

</llo_original>
